<compile_context>
chip_gen: v6e
topology: v6e:2x2x1
jax: 0.10.0
libtpu: 0.0.40
codegen_flags: <defaults>
</compile_context>

<pallas_src>
import jax
import jax.numpy as jnp
from jax.experimental import pallas as pl
from jax.experimental.pallas import tpu as pltpu


def lstm_fc_kernel(x_ref, wih_ref, whh_ref, b_ref, fcw_ref, fcb_ref, out_ref):
    """Full LSTM recurrence + final FC for one batch block.

    x_ref   : (T, TB, E) f32  time-major embedded sequence block
    wih_ref : (E, 4H)    f32  input->gates weights (transposed vs torch)
    whh_ref : (H, 4H)    f32  hidden->gates weights (transposed vs torch)
    b_ref   : (1, 4H)    f32  b_ih + b_hh
    fcw_ref : (1, H)     f32  fc weight row
    fcb_ref : (1, 1)     f32  fc bias
    out_ref : (TB, 1)    f32  fc(h_T)
    """
    T, TB, E = x_ref.shape
    H = whh_ref.shape[0]
    G = 4 * H

    # Hoisted input projection: one (T*TB, E) x (E, 4H) MXU pass for all timesteps.
    # (Reshape only merges leading dims with TB == sublane-multiple -> layout no-op.)
    x_all = x_ref[...].reshape(T * TB, E)
    xw = (jnp.dot(x_all, wih_ref[...], preferred_element_type=jnp.float32)
          + b_ref[...])                                   # (T*TB, 4H)
    xw = xw.reshape(T, TB, G)

    whh = whh_ref[...]                                    # (H, 4H)

    h = jnp.zeros((TB, H), jnp.float32)
    c = jnp.zeros((TB, H), jnp.float32)

    # Fully unrolled recurrence; h, c live in vregs (< 1 vreg each at TB=8, H=32).
    for t in range(T):
        gates = xw[t] + jnp.dot(h, whh, preferred_element_type=jnp.float32)  # (TB, 4H)
        sig = jax.nn.sigmoid(gates)       # full-vreg EUP op, slice afterwards
        th = jnp.tanh(gates)              # full-vreg EUP op
        i_g = sig[:, 0 * H:1 * H]
        f_g = sig[:, 1 * H:2 * H]
        g_g = th[:, 2 * H:3 * H]
        o_g = sig[:, 3 * H:4 * H]
        c = f_g * c + i_g * g_g
        h = o_g * jnp.tanh(c)

    # fc(hidden[-1]) with out_features=1: VPU mul + lane reduction (no N=1 matmul).
    out_ref[...] = (jnp.sum(h * fcw_ref[...], axis=-1, keepdims=True)
                    + fcb_ref[...])


def lstm_model_forward(tokens, emb_table, w_ih, w_hh, b_ih, b_hh, fc_w, fc_b,
                       *, batch_block=None):
    """tokens: (B, T) int32. Returns (B, 1) float32, matching LSTMModel.forward."""
    B, T = tokens.shape
    E = emb_table.shape[1]
    H = w_hh.shape[1]
    G = 4 * H

    TB = B if batch_block is None else batch_block
    assert B % TB == 0, "batch_block must divide batch size"

    # Embedding lookup (gather = glue). Gather directly in time-major order so the
    # per-step slice inside the kernel is a free leading-axis index and no (B,T,E)
    # transpose is materialized in HBM.
    x_tm = emb_table[tokens.T]                      # (T, B, E)

    wih_t = w_ih.T                                  # (E, 4H)
    whh_t = w_hh.T                                  # (H, 4H)
    b = (b_ih + b_hh).reshape(1, G)                 # (1, 4H)
    fcw = fc_w.reshape(1, H)                        # (1, H)
    fcb = fc_b.reshape(1, 1)                        # (1, 1)

    return pl.pallas_call(
        lstm_fc_kernel,
        out_shape=jax.ShapeDtypeStruct((B, 1), jnp.float32),
        grid_spec=pltpu.PrefetchScalarGridSpec(
            num_scalar_prefetch=0,
            grid=(B // TB,),
            in_specs=[
                pl.BlockSpec((T, TB, E), lambda i: (0, i, 0)),   # batch-blocked seq
                pl.BlockSpec((E, G), lambda i: (0, 0)),          # resident weights
                pl.BlockSpec((H, G), lambda i: (0, 0)),
                pl.BlockSpec((1, G), lambda i: (0, 0)),
                pl.BlockSpec((1, H), lambda i: (0, 0)),
                pl.BlockSpec((1, 1), lambda i: (0, 0)),
            ],
            out_specs=pl.BlockSpec((TB, 1), lambda i: (i, 0)),
        ),
        compiler_params=pltpu.CompilerParams(
            dimension_semantics=("parallel",)),      # megacore batch split on v7x
    )(x_tm, wih_t, whh_t, b, fcw, fcb)


def _reference_forward(tokens, emb_table, w_ih, w_hh, b_ih, b_hh, fc_w, fc_b):
    """Pure-JAX reference replicating torch.nn.LSTM semantics (gate order i,f,g,o)."""
    B, T = tokens.shape
    H = w_hh.shape[1]
    x = emb_table[tokens]                     # (B, T, E)
    h = jnp.zeros((B, H), jnp.float32)
    c = jnp.zeros((B, H), jnp.float32)
    for t in range(T):
        g = x[:, t, :] @ w_ih.T + b_ih + h @ w_hh.T + b_hh
        i = jax.nn.sigmoid(g[:, 0 * H:1 * H])
        f = jax.nn.sigmoid(g[:, 1 * H:2 * H])
        gg = jnp.tanh(g[:, 2 * H:3 * H])
        o = jax.nn.sigmoid(g[:, 3 * H:4 * H])
        c = f * c + i * gg
        h = o * jnp.tanh(c)
    return h @ fc_w.T + fc_b


if __name__ == "__main__":
    vocab_size, embedding_dim, hidden_dim = 100, 32, 32
    B, T = 8, 8

    key = jax.random.PRNGKey(0)
    k_tok, k_emb, k_wih, k_whh, k_bih, k_bhh, k_fcw, k_fcb = jax.random.split(key, 8)

    tokens = jax.random.randint(k_tok, (B, T), 0, vocab_size, dtype=jnp.int32)

    emb_table = 0.1 * jax.random.normal(k_emb, (vocab_size, embedding_dim), jnp.float32)
    w_ih = 0.1 * jax.random.normal(k_wih, (4 * hidden_dim, embedding_dim), jnp.float32)
    w_hh = 0.1 * jax.random.normal(k_whh, (4 * hidden_dim, hidden_dim), jnp.float32)
    b_ih = 0.1 * jax.random.normal(k_bih, (4 * hidden_dim,), jnp.float32)
    b_hh = 0.1 * jax.random.normal(k_bhh, (4 * hidden_dim,), jnp.float32)
    fc_w = 0.1 * jax.random.normal(k_fcw, (1, hidden_dim), jnp.float32)
    fc_b = 0.1 * jax.random.normal(k_fcb, (1,), jnp.float32)

    out = lstm_model_forward(tokens, emb_table, w_ih, w_hh, b_ih, b_hh, fc_w, fc_b)
    out = jax.block_until_ready(out)

    ref = _reference_forward(tokens, emb_table, w_ih, w_hh, b_ih, b_hh, fc_w, fc_b)
    assert out.shape == (B, 1)
    assert jnp.allclose(out, ref, atol=1e-5, rtol=1e-5)

    print("KERNEL_OK")
</pallas_src>

<mosaic_0001>
module attributes {stable_mosaic.version = 11 : i64} {
  func.func @lstm_fc_kernel(%arg0: i32, %arg1: memref<8x8x32xf32, #tpu.memory_space<vmem>>, %arg2: memref<32x128xf32, #tpu.memory_space<vmem>>, %arg3: memref<32x128xf32, #tpu.memory_space<vmem>>, %arg4: memref<1x128xf32, #tpu.memory_space<vmem>>, %arg5: memref<1x32xf32, #tpu.memory_space<vmem>>, %arg6: memref<1x1xf32, #tpu.memory_space<vmem>>, %arg7: memref<8x1xf32, #tpu.memory_space<vmem>>) attributes {dimension_semantics = [#tpu.dimension_semantics<parallel>], iteration_bounds = array<i64: 1>, scalar_prefetch = 0 : i64, scratch_operands = 0 : i64, tpu.core_type = #tpu.core_type<tc>, window_params = [{transform_indices = @transform_0, window_bounds = array<i64: 8, 8, 32>}, {pipeline_mode = #tpu.pipeline_mode<synchronous>, transform_indices = @transform_1, window_bounds = array<i64: 32, 128>}, {pipeline_mode = #tpu.pipeline_mode<synchronous>, transform_indices = @transform_2, window_bounds = array<i64: 32, 128>}, {pipeline_mode = #tpu.pipeline_mode<synchronous>, transform_indices = @transform_3, window_bounds = array<i64: 1, 128>}, {pipeline_mode = #tpu.pipeline_mode<synchronous>, transform_indices = @transform_4, window_bounds = array<i64: 1, 32>}, {pipeline_mode = #tpu.pipeline_mode<synchronous>, transform_indices = @transform_5, window_bounds = array<i64: 1, 1>}, {transform_indices = @transform_6, window_bounds = array<i64: 8, 1>}]} {
    %c0 = arith.constant 0 : index
    %c0_0 = arith.constant 0 : index
    %c0_1 = arith.constant 0 : index
    %0 = vector.load %arg1[%c0, %c0_0, %c0_1] : memref<8x8x32xf32, #tpu.memory_space<vmem>>, vector<8x8x32xf32>
    %1 = vector.shape_cast %0 : vector<8x8x32xf32> to vector<64x32xf32>
    %c0_2 = arith.constant 0 : index
    %c0_3 = arith.constant 0 : index
    %2 = vector.load %arg2[%c0_2, %c0_3] : memref<32x128xf32, #tpu.memory_space<vmem>>, vector<32x128xf32>
    %cst = arith.constant dense<0.000000e+00> : vector<64x128xf32>
    %3 = tpu.matmul %1, %2, %cst {dimension_numbers = #tpu.dot_dimension_numbers<[1], [0], [0], [1], [0, 0, 1, 1], [], []>} : vector<64x32xf32>, vector<32x128xf32>, vector<64x128xf32> -> vector<64x128xf32>
    %c0_4 = arith.constant 0 : index
    %c0_5 = arith.constant 0 : index
    %4 = vector.load %arg4[%c0_4, %c0_5] : memref<1x128xf32, #tpu.memory_space<vmem>>, vector<1x128xf32>
    %5 = vector.broadcast %4 : vector<1x128xf32> to vector<64x128xf32>
    %6 = arith.addf %3, %5 : vector<64x128xf32>
    %7 = vector.shape_cast %6 : vector<64x128xf32> to vector<8x8x128xf32>
    %c0_6 = arith.constant 0 : index
    %c0_7 = arith.constant 0 : index
    %8 = vector.load %arg3[%c0_6, %c0_7] : memref<32x128xf32, #tpu.memory_space<vmem>>, vector<32x128xf32>
    %cst_8 = arith.constant 0.000000e+00 : f32
    %9 = vector.broadcast %cst_8 : f32 to vector<8x32xf32>
    %cst_9 = arith.constant 0.000000e+00 : f32
    %10 = vector.broadcast %cst_9 : f32 to vector<8x32xf32>
    %11 = vector.extract_strided_slice %7 {offsets = [0, 0, 0], sizes = [1, 8, 128], strides = [1, 1, 1]} : vector<8x8x128xf32> to vector<1x8x128xf32>
    %12 = vector.shape_cast %11 : vector<1x8x128xf32> to vector<8x128xf32>
    %cst_10 = arith.constant dense<0.000000e+00> : vector<8x128xf32>
    %13 = tpu.matmul %9, %8, %cst_10 {dimension_numbers = #tpu.dot_dimension_numbers<[1], [0], [0], [1], [0, 0, 1, 1], [], []>} : vector<8x32xf32>, vector<32x128xf32>, vector<8x128xf32> -> vector<8x128xf32>
    %14 = arith.addf %12, %13 : vector<8x128xf32>
    %15 = arith.negf %14 : vector<8x128xf32>
    %16 = math.exp %15 : vector<8x128xf32>
    %cst_11 = arith.constant 1.000000e+00 : f32
    %17 = vector.broadcast %cst_11 : f32 to vector<8x128xf32>
    %18 = arith.addf %17, %16 : vector<8x128xf32>
    %19 = arith.divf %17, %18 : vector<8x128xf32>
    %20 = math.tanh %14 : vector<8x128xf32>
    %21 = vector.extract_strided_slice %19 {offsets = [0, 0], sizes = [8, 32], strides = [1, 1]} : vector<8x128xf32> to vector<8x32xf32>
    %22 = vector.extract_strided_slice %19 {offsets = [0, 32], sizes = [8, 32], strides = [1, 1]} : vector<8x128xf32> to vector<8x32xf32>
    %23 = vector.extract_strided_slice %20 {offsets = [0, 64], sizes = [8, 32], strides = [1, 1]} : vector<8x128xf32> to vector<8x32xf32>
    %24 = vector.extract_strided_slice %19 {offsets = [0, 96], sizes = [8, 32], strides = [1, 1]} : vector<8x128xf32> to vector<8x32xf32>
    %25 = arith.mulf %22, %10 : vector<8x32xf32>
    %26 = arith.mulf %21, %23 : vector<8x32xf32>
    %27 = arith.addf %25, %26 : vector<8x32xf32>
    %28 = math.tanh %27 : vector<8x32xf32>
    %29 = arith.mulf %24, %28 : vector<8x32xf32>
    %30 = vector.extract_strided_slice %7 {offsets = [1, 0, 0], sizes = [1, 8, 128], strides = [1, 1, 1]} : vector<8x8x128xf32> to vector<1x8x128xf32>
    %31 = vector.shape_cast %30 : vector<1x8x128xf32> to vector<8x128xf32>
    %cst_12 = arith.constant dense<0.000000e+00> : vector<8x128xf32>
    %32 = tpu.matmul %29, %8, %cst_12 {dimension_numbers = #tpu.dot_dimension_numbers<[1], [0], [0], [1], [0, 0, 1, 1], [], []>} : vector<8x32xf32>, vector<32x128xf32>, vector<8x128xf32> -> vector<8x128xf32>
    %33 = arith.addf %31, %32 : vector<8x128xf32>
    %34 = arith.negf %33 : vector<8x128xf32>
    %35 = math.exp %34 : vector<8x128xf32>
    %cst_13 = arith.constant 1.000000e+00 : f32
    %36 = vector.broadcast %cst_13 : f32 to vector<8x128xf32>
    %37 = arith.addf %36, %35 : vector<8x128xf32>
    %38 = arith.divf %36, %37 : vector<8x128xf32>
    %39 = math.tanh %33 : vector<8x128xf32>
    %40 = vector.extract_strided_slice %38 {offsets = [0, 0], sizes = [8, 32], strides = [1, 1]} : vector<8x128xf32> to vector<8x32xf32>
    %41 = vector.extract_strided_slice %38 {offsets = [0, 32], sizes = [8, 32], strides = [1, 1]} : vector<8x128xf32> to vector<8x32xf32>
    %42 = vector.extract_strided_slice %39 {offsets = [0, 64], sizes = [8, 32], strides = [1, 1]} : vector<8x128xf32> to vector<8x32xf32>
    %43 = vector.extract_strided_slice %38 {offsets = [0, 96], sizes = [8, 32], strides = [1, 1]} : vector<8x128xf32> to vector<8x32xf32>
    %44 = arith.mulf %41, %27 : vector<8x32xf32>
    %45 = arith.mulf %40, %42 : vector<8x32xf32>
    %46 = arith.addf %44, %45 : vector<8x32xf32>
    %47 = math.tanh %46 : vector<8x32xf32>
    %48 = arith.mulf %43, %47 : vector<8x32xf32>
    %49 = vector.extract_strided_slice %7 {offsets = [2, 0, 0], sizes = [1, 8, 128], strides = [1, 1, 1]} : vector<8x8x128xf32> to vector<1x8x128xf32>
    %50 = vector.shape_cast %49 : vector<1x8x128xf32> to vector<8x128xf32>
    %cst_14 = arith.constant dense<0.000000e+00> : vector<8x128xf32>
    %51 = tpu.matmul %48, %8, %cst_14 {dimension_numbers = #tpu.dot_dimension_numbers<[1], [0], [0], [1], [0, 0, 1, 1], [], []>} : vector<8x32xf32>, vector<32x128xf32>, vector<8x128xf32> -> vector<8x128xf32>
    %52 = arith.addf %50, %51 : vector<8x128xf32>
    %53 = arith.negf %52 : vector<8x128xf32>
    %54 = math.exp %53 : vector<8x128xf32>
    %cst_15 = arith.constant 1.000000e+00 : f32
    %55 = vector.broadcast %cst_15 : f32 to vector<8x128xf32>
    %56 = arith.addf %55, %54 : vector<8x128xf32>
    %57 = arith.divf %55, %56 : vector<8x128xf32>
    %58 = math.tanh %52 : vector<8x128xf32>
    %59 = vector.extract_strided_slice %57 {offsets = [0, 0], sizes = [8, 32], strides = [1, 1]} : vector<8x128xf32> to vector<8x32xf32>
    %60 = vector.extract_strided_slice %57 {offsets = [0, 32], sizes = [8, 32], strides = [1, 1]} : vector<8x128xf32> to vector<8x32xf32>
    %61 = vector.extract_strided_slice %58 {offsets = [0, 64], sizes = [8, 32], strides = [1, 1]} : vector<8x128xf32> to vector<8x32xf32>
    %62 = vector.extract_strided_slice %57 {offsets = [0, 96], sizes = [8, 32], strides = [1, 1]} : vector<8x128xf32> to vector<8x32xf32>
    %63 = arith.mulf %60, %46 : vector<8x32xf32>
    %64 = arith.mulf %59, %61 : vector<8x32xf32>
    %65 = arith.addf %63, %64 : vector<8x32xf32>
    %66 = math.tanh %65 : vector<8x32xf32>
    %67 = arith.mulf %62, %66 : vector<8x32xf32>
    %68 = vector.extract_strided_slice %7 {offsets = [3, 0, 0], sizes = [1, 8, 128], strides = [1, 1, 1]} : vector<8x8x128xf32> to vector<1x8x128xf32>
    %69 = vector.shape_cast %68 : vector<1x8x128xf32> to vector<8x128xf32>
    %cst_16 = arith.constant dense<0.000000e+00> : vector<8x128xf32>
    %70 = tpu.matmul %67, %8, %cst_16 {dimension_numbers = #tpu.dot_dimension_numbers<[1], [0], [0], [1], [0, 0, 1, 1], [], []>} : vector<8x32xf32>, vector<32x128xf32>, vector<8x128xf32> -> vector<8x128xf32>
    %71 = arith.addf %69, %70 : vector<8x128xf32>
    %72 = arith.negf %71 : vector<8x128xf32>
    %73 = math.exp %72 : vector<8x128xf32>
    %cst_17 = arith.constant 1.000000e+00 : f32
    %74 = vector.broadcast %cst_17 : f32 to vector<8x128xf32>
    %75 = arith.addf %74, %73 : vector<8x128xf32>
    %76 = arith.divf %74, %75 : vector<8x128xf32>
    %77 = math.tanh %71 : vector<8x128xf32>
    %78 = vector.extract_strided_slice %76 {offsets = [0, 0], sizes = [8, 32], strides = [1, 1]} : vector<8x128xf32> to vector<8x32xf32>
    %79 = vector.extract_strided_slice %76 {offsets = [0, 32], sizes = [8, 32], strides = [1, 1]} : vector<8x128xf32> to vector<8x32xf32>
    %80 = vector.extract_strided_slice %77 {offsets = [0, 64], sizes = [8, 32], strides = [1, 1]} : vector<8x128xf32> to vector<8x32xf32>
    %81 = vector.extract_strided_slice %76 {offsets = [0, 96], sizes = [8, 32], strides = [1, 1]} : vector<8x128xf32> to vector<8x32xf32>
    %82 = arith.mulf %79, %65 : vector<8x32xf32>
    %83 = arith.mulf %78, %80 : vector<8x32xf32>
    %84 = arith.addf %82, %83 : vector<8x32xf32>
    %85 = math.tanh %84 : vector<8x32xf32>
    %86 = arith.mulf %81, %85 : vector<8x32xf32>
    %87 = vector.extract_strided_slice %7 {offsets = [4, 0, 0], sizes = [1, 8, 128], strides = [1, 1, 1]} : vector<8x8x128xf32> to vector<1x8x128xf32>
    %88 = vector.shape_cast %87 : vector<1x8x128xf32> to vector<8x128xf32>
    %cst_18 = arith.constant dense<0.000000e+00> : vector<8x128xf32>
    %89 = tpu.matmul %86, %8, %cst_18 {dimension_numbers = #tpu.dot_dimension_numbers<[1], [0], [0], [1], [0, 0, 1, 1], [], []>} : vector<8x32xf32>, vector<32x128xf32>, vector<8x128xf32> -> vector<8x128xf32>
    %90 = arith.addf %88, %89 : vector<8x128xf32>
    %91 = arith.negf %90 : vector<8x128xf32>
    %92 = math.exp %91 : vector<8x128xf32>
    %cst_19 = arith.constant 1.000000e+00 : f32
    %93 = vector.broadcast %cst_19 : f32 to vector<8x128xf32>
    %94 = arith.addf %93, %92 : vector<8x128xf32>
    %95 = arith.divf %93, %94 : vector<8x128xf32>
    %96 = math.tanh %90 : vector<8x128xf32>
    %97 = vector.extract_strided_slice %95 {offsets = [0, 0], sizes = [8, 32], strides = [1, 1]} : vector<8x128xf32> to vector<8x32xf32>
    %98 = vector.extract_strided_slice %95 {offsets = [0, 32], sizes = [8, 32], strides = [1, 1]} : vector<8x128xf32> to vector<8x32xf32>
    %99 = vector.extract_strided_slice %96 {offsets = [0, 64], sizes = [8, 32], strides = [1, 1]} : vector<8x128xf32> to vector<8x32xf32>
    %100 = vector.extract_strided_slice %95 {offsets = [0, 96], sizes = [8, 32], strides = [1, 1]} : vector<8x128xf32> to vector<8x32xf32>
    %101 = arith.mulf %98, %84 : vector<8x32xf32>
    %102 = arith.mulf %97, %99 : vector<8x32xf32>
    %103 = arith.addf %101, %102 : vector<8x32xf32>
    %104 = math.tanh %103 : vector<8x32xf32>
    %105 = arith.mulf %100, %104 : vector<8x32xf32>
    %106 = vector.extract_strided_slice %7 {offsets = [5, 0, 0], sizes = [1, 8, 128], strides = [1, 1, 1]} : vector<8x8x128xf32> to vector<1x8x128xf32>
    %107 = vector.shape_cast %106 : vector<1x8x128xf32> to vector<8x128xf32>
    %cst_20 = arith.constant dense<0.000000e+00> : vector<8x128xf32>
    %108 = tpu.matmul %105, %8, %cst_20 {dimension_numbers = #tpu.dot_dimension_numbers<[1], [0], [0], [1], [0, 0, 1, 1], [], []>} : vector<8x32xf32>, vector<32x128xf32>, vector<8x128xf32> -> vector<8x128xf32>
    %109 = arith.addf %107, %108 : vector<8x128xf32>
    %110 = arith.negf %109 : vector<8x128xf32>
    %111 = math.exp %110 : vector<8x128xf32>
    %cst_21 = arith.constant 1.000000e+00 : f32
    %112 = vector.broadcast %cst_21 : f32 to vector<8x128xf32>
    %113 = arith.addf %112, %111 : vector<8x128xf32>
    %114 = arith.divf %112, %113 : vector<8x128xf32>
    %115 = math.tanh %109 : vector<8x128xf32>
    %116 = vector.extract_strided_slice %114 {offsets = [0, 0], sizes = [8, 32], strides = [1, 1]} : vector<8x128xf32> to vector<8x32xf32>
    %117 = vector.extract_strided_slice %114 {offsets = [0, 32], sizes = [8, 32], strides = [1, 1]} : vector<8x128xf32> to vector<8x32xf32>
    %118 = vector.extract_strided_slice %115 {offsets = [0, 64], sizes = [8, 32], strides = [1, 1]} : vector<8x128xf32> to vector<8x32xf32>
    %119 = vector.extract_strided_slice %114 {offsets = [0, 96], sizes = [8, 32], strides = [1, 1]} : vector<8x128xf32> to vector<8x32xf32>
    %120 = arith.mulf %117, %103 : vector<8x32xf32>
    %121 = arith.mulf %116, %118 : vector<8x32xf32>
    %122 = arith.addf %120, %121 : vector<8x32xf32>
    %123 = math.tanh %122 : vector<8x32xf32>
    %124 = arith.mulf %119, %123 : vector<8x32xf32>
    %125 = vector.extract_strided_slice %7 {offsets = [6, 0, 0], sizes = [1, 8, 128], strides = [1, 1, 1]} : vector<8x8x128xf32> to vector<1x8x128xf32>
    %126 = vector.shape_cast %125 : vector<1x8x128xf32> to vector<8x128xf32>
    %cst_22 = arith.constant dense<0.000000e+00> : vector<8x128xf32>
    %127 = tpu.matmul %124, %8, %cst_22 {dimension_numbers = #tpu.dot_dimension_numbers<[1], [0], [0], [1], [0, 0, 1, 1], [], []>} : vector<8x32xf32>, vector<32x128xf32>, vector<8x128xf32> -> vector<8x128xf32>
    %128 = arith.addf %126, %127 : vector<8x128xf32>
    %129 = arith.negf %128 : vector<8x128xf32>
    %130 = math.exp %129 : vector<8x128xf32>
    %cst_23 = arith.constant 1.000000e+00 : f32
    %131 = vector.broadcast %cst_23 : f32 to vector<8x128xf32>
    %132 = arith.addf %131, %130 : vector<8x128xf32>
    %133 = arith.divf %131, %132 : vector<8x128xf32>
    %134 = math.tanh %128 : vector<8x128xf32>
    %135 = vector.extract_strided_slice %133 {offsets = [0, 0], sizes = [8, 32], strides = [1, 1]} : vector<8x128xf32> to vector<8x32xf32>
    %136 = vector.extract_strided_slice %133 {offsets = [0, 32], sizes = [8, 32], strides = [1, 1]} : vector<8x128xf32> to vector<8x32xf32>
    %137 = vector.extract_strided_slice %134 {offsets = [0, 64], sizes = [8, 32], strides = [1, 1]} : vector<8x128xf32> to vector<8x32xf32>
    %138 = vector.extract_strided_slice %133 {offsets = [0, 96], sizes = [8, 32], strides = [1, 1]} : vector<8x128xf32> to vector<8x32xf32>
    %139 = arith.mulf %136, %122 : vector<8x32xf32>
    %140 = arith.mulf %135, %137 : vector<8x32xf32>
    %141 = arith.addf %139, %140 : vector<8x32xf32>
    %142 = math.tanh %141 : vector<8x32xf32>
    %143 = arith.mulf %138, %142 : vector<8x32xf32>
    %144 = vector.extract_strided_slice %7 {offsets = [7, 0, 0], sizes = [1, 8, 128], strides = [1, 1, 1]} : vector<8x8x128xf32> to vector<1x8x128xf32>
    %145 = vector.shape_cast %144 : vector<1x8x128xf32> to vector<8x128xf32>
    %cst_24 = arith.constant dense<0.000000e+00> : vector<8x128xf32>
    %146 = tpu.matmul %143, %8, %cst_24 {dimension_numbers = #tpu.dot_dimension_numbers<[1], [0], [0], [1], [0, 0, 1, 1], [], []>} : vector<8x32xf32>, vector<32x128xf32>, vector<8x128xf32> -> vector<8x128xf32>
    %147 = arith.addf %145, %146 : vector<8x128xf32>
    %148 = arith.negf %147 : vector<8x128xf32>
    %149 = math.exp %148 : vector<8x128xf32>
    %cst_25 = arith.constant 1.000000e+00 : f32
    %150 = vector.broadcast %cst_25 : f32 to vector<8x128xf32>
    %151 = arith.addf %150, %149 : vector<8x128xf32>
    %152 = arith.divf %150, %151 : vector<8x128xf32>
    %153 = math.tanh %147 : vector<8x128xf32>
    %154 = vector.extract_strided_slice %152 {offsets = [0, 0], sizes = [8, 32], strides = [1, 1]} : vector<8x128xf32> to vector<8x32xf32>
    %155 = vector.extract_strided_slice %152 {offsets = [0, 32], sizes = [8, 32], strides = [1, 1]} : vector<8x128xf32> to vector<8x32xf32>
    %156 = vector.extract_strided_slice %153 {offsets = [0, 64], sizes = [8, 32], strides = [1, 1]} : vector<8x128xf32> to vector<8x32xf32>
    %157 = vector.extract_strided_slice %152 {offsets = [0, 96], sizes = [8, 32], strides = [1, 1]} : vector<8x128xf32> to vector<8x32xf32>
    %158 = arith.mulf %155, %141 : vector<8x32xf32>
    %159 = arith.mulf %154, %156 : vector<8x32xf32>
    %160 = arith.addf %158, %159 : vector<8x32xf32>
    %161 = math.tanh %160 : vector<8x32xf32>
    %162 = arith.mulf %157, %161 : vector<8x32xf32>
    %c0_26 = arith.constant 0 : index
    %c0_27 = arith.constant 0 : index
    %163 = vector.load %arg5[%c0_26, %c0_27] : memref<1x32xf32, #tpu.memory_space<vmem>>, vector<1x32xf32>
    %164 = vector.broadcast %163 : vector<1x32xf32> to vector<8x32xf32>
    %165 = arith.mulf %162, %164 : vector<8x32xf32>
    %cst_28 = arith.constant dense<0.000000e+00> : vector<8xf32>
    %166 = vector.multi_reduction <add>, %165, %cst_28 [1] : vector<8x32xf32> to vector<8xf32>
    %167 = vector.shape_cast %166 : vector<8xf32> to vector<8x1xf32>
    %c0_29 = arith.constant 0 : index
    %c0_30 = arith.constant 0 : index
    %168 = vector.load %arg6[%c0_29, %c0_30] : memref<1x1xf32, #tpu.memory_space<vmem>>, vector<1x1xf32>
    %169 = vector.broadcast %168 : vector<1x1xf32> to vector<8x1xf32>
    %170 = arith.addf %167, %169 : vector<8x1xf32>
    %c0_31 = arith.constant 0 : index
    %c0_32 = arith.constant 0 : index
    %171 = vector.load %arg7[%c0_31, %c0_32] : memref<8x1xf32, #tpu.memory_space<vmem>>, vector<8x1xf32>
    tpu.vector_store %arg7[%c0_31, %c0_32], %170 {strides = array<i32>} : memref<8x1xf32, #tpu.memory_space<vmem>>, vector<8x1xf32>,
    return
  }
  func.func @transform_0(%arg0: i32) -> (i32, i32, i32) {
    %c0_i32 = arith.constant 0 : i32
    %c0_i32_0 = arith.constant 0 : i32
    %c0_i32_1 = arith.constant 0 : i32
    return %c0_i32, %arg0, %c0_i32_0 : i32, i32, i32
  }
  func.func @transform_1(%arg0: i32) -> (i32, i32) {
    %c0_i32 = arith.constant 0 : i32
    %c0_i32_0 = arith.constant 0 : i32
    %c0_i32_1 = arith.constant 0 : i32
    return %c0_i32, %c0_i32_0 : i32, i32
  }
  func.func @transform_2(%arg0: i32) -> (i32, i32) {
    %c0_i32 = arith.constant 0 : i32
    %c0_i32_0 = arith.constant 0 : i32
    %c0_i32_1 = arith.constant 0 : i32
    return %c0_i32, %c0_i32_0 : i32, i32
  }
  func.func @transform_3(%arg0: i32) -> (i32, i32) {
    %c0_i32 = arith.constant 0 : i32
    %c0_i32_0 = arith.constant 0 : i32
    %c0_i32_1 = arith.constant 0 : i32
    return %c0_i32, %c0_i32_0 : i32, i32
  }
  func.func @transform_4(%arg0: i32) -> (i32, i32) {
    %c0_i32 = arith.constant 0 : i32
    %c0_i32_0 = arith.constant 0 : i32
    %c0_i32_1 = arith.constant 0 : i32
    return %c0_i32, %c0_i32_0 : i32, i32
  }
  func.func @transform_5(%arg0: i32) -> (i32, i32) {
    %c0_i32 = arith.constant 0 : i32
    %c0_i32_0 = arith.constant 0 : i32
    %c0_i32_1 = arith.constant 0 : i32
    return %c0_i32, %c0_i32_0 : i32, i32
  }
  func.func @transform_6(%arg0: i32) -> (i32, i32) {
    %c0_i32 = arith.constant 0 : i32
    %c0_i32_0 = arith.constant 0 : i32
    return %arg0, %c0_i32 : i32, i32
  }
}

</mosaic_0001>

<llo_original>
// kernel: tpu_custom_call.1
$region0: #{tpu_custom_call.1}
  #allocation0 [shape = 'u32[]', space=smem, size = 0x4, offset = 0x4, fixed_abs, tag = 'smem constant byte address 0x4 - core index']
  #allocation1 [shape = 'u32[144,128]{1,0:T(1,128)}', space=vmem, size = 0x12000, scoped, tag = 'internal scratch']
  #allocation2 [shape = 'f32[1,1]{1,0:T(1,128)S(1)}', space=vmem, size = 0x200, scoped, tag = 'scoped memory for tpu_custom_call.1']
  %s0 = inlined_call_operand.hbm [shape: f32[8,8,32], index: 0, kind: input, shape index: {}]
  %s1 = inlined_call_operand.hbm [shape: f32[32,128], index: 1, kind: input, shape index: {}]
  %s2 = inlined_call_operand.hbm [shape: f32[32,128], index: 2, kind: input, shape index: {}]
  %s3 = inlined_call_operand.vmem [shape: f32[1,128], index: 3, kind: input, shape index: {}]
  %s4 = inlined_call_operand.vmem [shape: f32[1,32], index: 4, kind: input, shape index: {}]
  %s5 = inlined_call_operand.<no memory space> [shape: f32[1,1], index: 5, kind: input, shape index: {}]
  %s6 = inlined_call_operand.vmem [shape: f32[8,1], index: 6, kind: output, shape index: {}]
  %s7 = sld [smem:[#allocation0]]
  $region46: #{tpu_custom_call.1} parent=0
    _
  %s9 = ssub.s32 1, %s7
  %s10 = scalar_select 0, %s9, %s7
  %v11 = vstv %s5
  %12 = vst [vmem:[#allocation2] sm:$0x1] %v11
  $region1: #{tpu_custom_call.1} parent=0
    #allocation3 [shape = 'u8[32768]{0}', space=vmem, size = 0x8000, scoped, tag = 'input window, operand 0, single buffered']
    #allocation4 [shape = 's32[1]{0}', space=sflag, size = 0x4, scoped, tag = 'scoped memory for tpu_custom_call.1']
    #allocation5 [shape = 'u8[16384]{0}', space=vmem, size = 0x4000, scoped, tag = 'input window, operand 1, single buffered']
    #allocation6 [shape = 's32[1]{0}', space=sflag, size = 0x4, scoped, tag = 'scoped memory for tpu_custom_call.1']
    #allocation7 [shape = 'u8[16384]{0}', space=vmem, size = 0x4000, scoped, tag = 'input window, operand 2, single buffered']
    %13 = vsyncpa [#allocation4], 0
    %14 = vsyncpa [#allocation6], 0
    // Predicated region
    $region2: #{tpu_custom_call.1} parent=1 // pred_check
      _
    $region3: #{tpu_custom_call.1} parent=1 // pred_check_branch
      %16 = sbr.rel (0) target = $region5
    $region4: #{tpu_custom_call.1} parent=1 // pred_region
      %s18 = ssub.s32 1024, 1024
      %19 = vsyncadd [#allocation4], %s18
      %s20 = sshll.u32 [#allocation3], 4
      %s21 = int_to_ptr.vmem [resolvable:$true] %s20
      %26 = dma.hbm_to_vmem [thread:$0]  %s0, 1024, %s21, [#allocation4], 128, 128, 8
    $region5: #{tpu_custom_call.1} parent=1 // pred_fallthru
      _
    // Predicated region
    $region6: #{tpu_custom_call.1} parent=1 // pred_check
      _
    $region7: #{tpu_custom_call.1} parent=1 // pred_check_branch
      %28 = sbr.rel (0) target = $region9
    $region8: #{tpu_custom_call.1} parent=1 // pred_region
      %s30 = ssub.s32 512, 512
      %31 = vsyncadd [#allocation6], %s30
      %s32 = sshll.u32 [#allocation5], 4
      %s33 = int_to_ptr.vmem [resolvable:$true] %s32
      %38 = dma.hbm_to_vmem [thread:$0]  %s1, 512, %s33, [#allocation6], 128, 128, 8
    $region9: #{tpu_custom_call.1} parent=1 // pred_fallthru
      _
    // Predicated region
    $region10: #{tpu_custom_call.1} parent=1 // pred_check
      _
    $region11: #{tpu_custom_call.1} parent=1 // pred_check_branch
      %40 = sbr.rel (0) target = $region13
    $region12: #{tpu_custom_call.1} parent=1 // pred_region
      %s42 = ssub.s32 512, 512
      %43 = vsyncadd [#allocation6], %s42
      %s44 = sshll.u32 [#allocation7], 4
      %s45 = int_to_ptr.vmem [resolvable:$true] %s44
      %50 = dma.hbm_to_vmem [thread:$0]  %s2, 512, %s45, [#allocation6], 128, 128, 8
    $region13: #{tpu_custom_call.1} parent=1 // pred_fallthru
      _
    // Predicated region
    $region14: #{tpu_custom_call.1} parent=1 // pred_check
      _
    $region15: #{tpu_custom_call.1} parent=1 // pred_check_branch
      %52 = sbr.rel (0) target = $region17
    $region16: #{tpu_custom_call.1} parent=1 // pred_region
      _
    $region17: #{tpu_custom_call.1} parent=1 // pred_fallthru
      _
    // Predicated region
    $region18: #{tpu_custom_call.1} parent=1 // pred_check
      _
    $region19: #{tpu_custom_call.1} parent=1 // pred_check_branch
      %54 = sbr.rel (0) target = $region21
    $region20: #{tpu_custom_call.1} parent=1 // pred_region
      _
    $region21: #{tpu_custom_call.1} parent=1 // pred_fallthru
      _
    // Predicated region
    $region22: #{tpu_custom_call.1} parent=1 // pred_check
      _
    $region23: #{tpu_custom_call.1} parent=1 // pred_check_branch
      %56 = sbr.rel (0) target = $region25
    $region24: #{tpu_custom_call.1} parent=1 // pred_region
      _
    $region25: #{tpu_custom_call.1} parent=1 // pred_fallthru
      _
    // Predicated region
    $region26: #{tpu_custom_call.1} parent=1 // pred_check
      _
    $region27: #{tpu_custom_call.1} parent=1 // pred_check_branch
      %58 = sbr.rel (0) target = $region29
    $region28: #{tpu_custom_call.1} parent=1 // pred_region
      %59 = dma.done [#allocation4], 1024
    $region29: #{tpu_custom_call.1} parent=1 // pred_fallthru
      _
    // Predicated region
    $region30: #{tpu_custom_call.1} parent=1 // pred_check
      _
    $region31: #{tpu_custom_call.1} parent=1 // pred_check_branch
      %61 = sbr.rel (0) target = $region33
    $region32: #{tpu_custom_call.1} parent=1 // pred_region
      %62 = dma.done [#allocation6], 512
    $region33: #{tpu_custom_call.1} parent=1 // pred_fallthru
      _
    // Predicated region
    $region34: #{tpu_custom_call.1} parent=1 // pred_check
      _
    $region35: #{tpu_custom_call.1} parent=1 // pred_check_branch
      %64 = sbr.rel (0) target = $region37
    $region36: #{tpu_custom_call.1} parent=1 // pred_region
      %65 = dma.done [#allocation6], 512
    $region37: #{tpu_custom_call.1} parent=1 // pred_fallthru
      _
    %v66 = vld [vmem:[#allocation3] sm:$0xff]
    %v67 = vld [vmem:[#allocation3 + $0x8] sm:$0xff]
    %v68 = vld [vmem:[#allocation3 + $0x10] sm:$0xff]
    %v69 = vld [vmem:[#allocation3 + $0x18] sm:$0xff]
    %v70 = vld [vmem:[#allocation3 + $0x20] sm:$0xff]
    %v71 = vld [vmem:[#allocation3 + $0x28] sm:$0xff]
    %v72 = vld [vmem:[#allocation3 + $0x30] sm:$0xff]
    %v73 = vld [vmem:[#allocation3 + $0x38] sm:$0xff]
    %v74 = vld [vmem:[#allocation5] sm:$0xff]
    %v75 = vld [vmem:[#allocation5 + $0x8] sm:$0xff]
    %v76 = vld [vmem:[#allocation5 + $0x10] sm:$0xff]
    %v77 = vld [vmem:[#allocation5 + $0x18] sm:$0xff]
    %v78 = vld [vmem:[%s3] sm:$0x1]
    %v80 = vlaneseq
    %v81 = vshrl.u32 %v80, 7
    %v82 = vsub.s32 0, %v81
    %v83 = vrot.slane %v78, %v82
    %vm85 = vcmask 261120
    %v87 = vsel %vm85, %v66, 0
    %v90 = vsel %vm85, %v67, 0
    %v93 = vsel %vm85, %v68, 0
    %v96 = vsel %vm85, %v69, 0
    %v99 = vsel %vm85, %v70, 0
    %v102 = vsel %vm85, %v71, 0
    %v105 = vsel %vm85, %v72, 0
    %v108 = vsel %vm85, %v73, 0
    %110 = vmatprep.subr.mxu0 0.0
    %111 = vmatpush1.msra.mxu0 0.0
    %112 = vmatprep.subr.mxu0 0.0
    %113 = vmatpush1.msra.mxu0 0.0
    %114 = vmatprep.subr.mxu0 0.0
    %115 = vmatpush1.msra.mxu0 0.0
    %116 = vmatprep.subr.mxu0 0.0
    %117 = vmatpush1.msra.mxu0 0.0
    %118 = vmatprep.subr.mxu0 0.0
    %119 = vmatpush1.msra.mxu0 0.0
    %120 = vmatprep.subr.mxu0 0.0
    %121 = vmatpush1.msra.mxu0 0.0
    %122 = vmatprep.subr.mxu0 0.0
    %123 = vmatpush1.msra.mxu0 0.0
    %124 = vmatprep.subr.mxu0 0.0
    %125 = vmatpush1.msra.mxu0 0.0
    %126 = vmatprep.subr.mxu0 0.0
    %127 = vmatpush1.msra.mxu0 0.0
    %128 = vmatprep.subr.mxu0 0.0
    %129 = vmatpush1.msra.mxu0 0.0
    %130 = vmatprep.subr.mxu0 0.0
    %131 = vmatpush1.msra.mxu0 0.0
    %132 = vmatprep.subr.mxu0 0.0
    %133 = vmatpush1.msra.mxu0 0.0
    %134 = vmatprep.subr.mxu0 0.0
    %135 = vmatpush1.msra.mxu0 %v77
    %136 = vmatprep.subr.mxu0 0.0
    %137 = vmatpush1.msra.mxu0 %v76
    %138 = vmatprep.subr.mxu0 0.0
    %139 = vmatpush1.msra.mxu0 %v75
    %140 = vmatprep.subr.mxu0 0.0
    %141 = vmatpush1.msra.mxu0 %v74
    %142 = vmatprep.subr.mxu0 0.0
    %143 = vmatpush2.msra.mxu0 0.0
    %144 = vmatprep.subr.mxu0 0.0
    %145 = vmatpush2.msra.mxu0 0.0
    %146 = vmatprep.subr.mxu0 0.0
    %147 = vmatpush2.msra.mxu0 0.0
    %148 = vmatprep.subr.mxu0 0.0
    %149 = vmatpush2.msra.mxu0 0.0
    %150 = vmatprep.subr.mxu0 0.0
    %151 = vmatpush2.msra.mxu0 0.0
    %152 = vmatprep.subr.mxu0 0.0
    %153 = vmatpush2.msra.mxu0 0.0
    %154 = vmatprep.subr.mxu0 0.0
    %155 = vmatpush2.msra.mxu0 0.0
    %156 = vmatprep.subr.mxu0 0.0
    %157 = vmatpush2.msra.mxu0 0.0
    %158 = vmatprep.subr.mxu0 0.0
    %159 = vmatpush2.msra.mxu0 0.0
    %160 = vmatprep.subr.mxu0 0.0
    %161 = vmatpush2.msra.mxu0 0.0
    %162 = vmatprep.subr.mxu0 0.0
    %163 = vmatpush2.msra.mxu0 0.0
    %164 = vmatprep.subr.mxu0 0.0
    %165 = vmatpush2.msra.mxu0 0.0
    %166 = vmatprep.subr.mxu0 0.0
    %167 = vmatpush2.msra.mxu0 0.0
    %168 = vmatprep.subr.mxu0 0.0
    %169 = vmatpush2.msra.mxu0 0.0
    %170 = vmatprep.subr.mxu0 0.0
    %171 = vmatpush2.msra.mxu0 0.0
    %172 = vmatprep.subr.mxu0 0.0
    %173 = vmatpush2.msra.mxu0 0.0
    %174 = vmatprep.mubr.f32.mxu0 0.0
    %175 = vmatmul.mubr.f32.gmra.mxu0 %v87
    %v176 = vpop.f32.mrf.mxu0
    %v177 = vadd.f32 %v83, %v176
    %v178 = vpop.f32.mrf.mxu0
    %179 = vmatprep.mubr.f32.mxu0 0.0
    %180 = vmatmul.mubr.f32.gmra.mxu0 %v90
    %v181 = vpop.f32.mrf.mxu0
    %v182 = vadd.f32 %v83, %v181
    %v183 = vpop.f32.mrf.mxu0
    %184 = vmatprep.mubr.f32.mxu0 0.0
    %185 = vmatmul.mubr.f32.gmra.mxu0 %v93
    %v186 = vpop.f32.mrf.mxu0
    %v187 = vadd.f32 %v83, %v186
    %v188 = vpop.f32.mrf.mxu0
    %189 = vmatprep.mubr.f32.mxu0 0.0
    %190 = vmatmul.mubr.f32.gmra.mxu0 %v96
    %v191 = vpop.f32.mrf.mxu0
    %v192 = vadd.f32 %v83, %v191
    %v193 = vpop.f32.mrf.mxu0
    %194 = vmatprep.mubr.f32.mxu0 0.0
    %195 = vmatmul.mubr.f32.gmra.mxu0 %v99
    %v196 = vpop.f32.mrf.mxu0
    %v197 = vadd.f32 %v83, %v196
    %v198 = vpop.f32.mrf.mxu0
    %199 = vmatprep.mubr.f32.mxu0 0.0
    %200 = vmatmul.mubr.f32.gmra.mxu0 %v102
    %v201 = vpop.f32.mrf.mxu0
    %v202 = vadd.f32 %v83, %v201
    %v203 = vpop.f32.mrf.mxu0
    %204 = vmatprep.mubr.f32.mxu0 0.0
    %205 = vmatmul.mubr.f32.gmra.mxu0 %v105
    %v206 = vpop.f32.mrf.mxu0
    %v207 = vadd.f32 %v83, %v206
    %v208 = vpop.f32.mrf.mxu0
    %209 = vmatprep.mubr.f32.mxu0 0.0
    %210 = vmatmul.mubr.f32.gmra.mxu0 %v108
    %v211 = vpop.f32.mrf.mxu0
    %v212 = vadd.f32 %v83, %v211
    %v213 = vpop.f32.mrf.mxu0
    %214 = vdwg.mxu0
    %v215 = vld [vmem:[#allocation7] sm:$0xff]
    %v216 = vld [vmem:[#allocation7 + $0x8] sm:$0xff]
    %v217 = vld [vmem:[#allocation7 + $0x10] sm:$0xff]
    %v218 = vld [vmem:[#allocation7 + $0x18] sm:$0xff]
    %v220 = vsel %vm85, 0.0, 0
    %222 = vmatprep.subr.mxu0 0.0
    %223 = vmatpush1.msra.mxu0 0.0
    %224 = vmatprep.subr.mxu0 0.0
    %225 = vmatpush1.msra.mxu0 0.0
    %226 = vmatprep.subr.mxu0 0.0
    %227 = vmatpush1.msra.mxu0 0.0
    %228 = vmatprep.subr.mxu0 0.0
    %229 = vmatpush1.msra.mxu0 0.0
    %230 = vmatprep.subr.mxu0 0.0
    %231 = vmatpush1.msra.mxu0 0.0
    %232 = vmatprep.subr.mxu0 0.0
    %233 = vmatpush1.msra.mxu0 0.0
    %234 = vmatprep.subr.mxu0 0.0
    %235 = vmatpush1.msra.mxu0 0.0
    %236 = vmatprep.subr.mxu0 0.0
    %237 = vmatpush1.msra.mxu0 0.0
    %238 = vmatprep.subr.mxu0 0.0
    %239 = vmatpush1.msra.mxu0 0.0
    %240 = vmatprep.subr.mxu0 0.0
    %241 = vmatpush1.msra.mxu0 0.0
    %242 = vmatprep.subr.mxu0 0.0
    %243 = vmatpush1.msra.mxu0 0.0
    %244 = vmatprep.subr.mxu0 0.0
    %245 = vmatpush1.msra.mxu0 0.0
    %246 = vmatprep.subr.mxu0 0.0
    %247 = vmatpush1.msra.mxu0 %v218
    %248 = vmatprep.subr.mxu0 0.0
    %249 = vmatpush1.msra.mxu0 %v217
    %250 = vmatprep.subr.mxu0 0.0
    %251 = vmatpush1.msra.mxu0 %v216
    %252 = vmatprep.subr.mxu0 0.0
    %253 = vmatpush1.msra.mxu0 %v215
    %254 = vmatprep.subr.mxu0 0.0
    %255 = vmatpush2.msra.mxu0 0.0
    %256 = vmatprep.subr.mxu0 0.0
    %257 = vmatpush2.msra.mxu0 0.0
    %258 = vmatprep.subr.mxu0 0.0
    %259 = vmatpush2.msra.mxu0 0.0
    %260 = vmatprep.subr.mxu0 0.0
    %261 = vmatpush2.msra.mxu0 0.0
    %262 = vmatprep.subr.mxu0 0.0
    %263 = vmatpush2.msra.mxu0 0.0
    %264 = vmatprep.subr.mxu0 0.0
    %265 = vmatpush2.msra.mxu0 0.0
    %266 = vmatprep.subr.mxu0 0.0
    %267 = vmatpush2.msra.mxu0 0.0
    %268 = vmatprep.subr.mxu0 0.0
    %269 = vmatpush2.msra.mxu0 0.0
    %270 = vmatprep.subr.mxu0 0.0
    %271 = vmatpush2.msra.mxu0 0.0
    %272 = vmatprep.subr.mxu0 0.0
    %273 = vmatpush2.msra.mxu0 0.0
    %274 = vmatprep.subr.mxu0 0.0
    %275 = vmatpush2.msra.mxu0 0.0
    %276 = vmatprep.subr.mxu0 0.0
    %277 = vmatpush2.msra.mxu0 0.0
    %278 = vmatprep.subr.mxu0 0.0
    %279 = vmatpush2.msra.mxu0 0.0
    %280 = vmatprep.subr.mxu0 0.0
    %281 = vmatpush2.msra.mxu0 0.0
    %282 = vmatprep.subr.mxu0 0.0
    %283 = vmatpush2.msra.mxu0 0.0
    %284 = vmatprep.subr.mxu0 0.0
    %285 = vmatpush2.msra.mxu0 0.0
    %286 = vmatprep.mubr.f32.mxu0 0.0
    %287 = vmatmul.mubr.f32.gmra.mxu0 %v220
    %v288 = vpop.f32.mrf.mxu0
    %v289 = vadd.f32 0.0, %v288
    %v290 = vpop.f32.mrf.mxu0
    %291 = vdwg.mxu0
    %v292 = vadd.f32 %v177, %v289
    %v293 = vxor.u32 %v292, 2147483648
    %v294 = vmul.f32 %v293, 1.442695
    %v295 = vpow.pop %v294
    %v296 = vadd.f32 %v295, 1.0
    %v297 = vrcp.pop %v296
    %v298 = vmul.f32 1.0, %v297
    %v299 = vtanh.pop %v292
    %v300 = vmul.f32 %v298, 0.0
    %302 = vrot.lane.b32.xlu0 %v299, 64
    %v303 = vpop.permute.xlu0 %302
    %v305 = vmul.f32 %v298, %v303
    %307 = vrot.lane.b32.xlu0 %v305, 32
    %v308 = vpop.permute.xlu0 %307
    %v310 = vadd.f32 %v300, %v308
    %v311 = vtanh.pop %v310
    %313 = vrot.lane.b32.xlu0 %v311, 64
    %v314 = vpop.permute.xlu0 %313
    %v316 = vmul.f32 %v298, %v314
    %318 = vrot.lane.b32.xlu0 %v316, 32
    %v319 = vpop.permute.xlu0 %318
    %v320 = vsel %vm85, %v319, 0
    %322 = vmatprep.subr.mxu0 0.0
    %323 = vmatpush1.msra.mxu0 0.0
    %324 = vmatprep.subr.mxu0 0.0
    %325 = vmatpush1.msra.mxu0 0.0
    %326 = vmatprep.subr.mxu0 0.0
    %327 = vmatpush1.msra.mxu0 0.0
    %328 = vmatprep.subr.mxu0 0.0
    %329 = vmatpush1.msra.mxu0 0.0
    %330 = vmatprep.subr.mxu0 0.0
    %331 = vmatpush1.msra.mxu0 0.0
    %332 = vmatprep.subr.mxu0 0.0
    %333 = vmatpush1.msra.mxu0 0.0
    %334 = vmatprep.subr.mxu0 0.0
    %335 = vmatpush1.msra.mxu0 0.0
    %336 = vmatprep.subr.mxu0 0.0
    %337 = vmatpush1.msra.mxu0 0.0
    %338 = vmatprep.subr.mxu0 0.0
    %339 = vmatpush1.msra.mxu0 0.0
    %340 = vmatprep.subr.mxu0 0.0
    %341 = vmatpush1.msra.mxu0 0.0
    %342 = vmatprep.subr.mxu0 0.0
    %343 = vmatpush1.msra.mxu0 0.0
    %344 = vmatprep.subr.mxu0 0.0
    %345 = vmatpush1.msra.mxu0 0.0
    %346 = vmatprep.subr.mxu0 0.0
    %347 = vmatpush1.msra.mxu0 %v218
    %348 = vmatprep.subr.mxu0 0.0
    %349 = vmatpush1.msra.mxu0 %v217
    %350 = vmatprep.subr.mxu0 0.0
    %351 = vmatpush1.msra.mxu0 %v216
    %352 = vmatprep.subr.mxu0 0.0
    %353 = vmatpush1.msra.mxu0 %v215
    %354 = vmatprep.subr.mxu0 0.0
    %355 = vmatpush2.msra.mxu0 0.0
    %356 = vmatprep.subr.mxu0 0.0
    %357 = vmatpush2.msra.mxu0 0.0
    %358 = vmatprep.subr.mxu0 0.0
    %359 = vmatpush2.msra.mxu0 0.0
    %360 = vmatprep.subr.mxu0 0.0
    %361 = vmatpush2.msra.mxu0 0.0
    %362 = vmatprep.subr.mxu0 0.0
    %363 = vmatpush2.msra.mxu0 0.0
    %364 = vmatprep.subr.mxu0 0.0
    %365 = vmatpush2.msra.mxu0 0.0
    %366 = vmatprep.subr.mxu0 0.0
    %367 = vmatpush2.msra.mxu0 0.0
    %368 = vmatprep.subr.mxu0 0.0
    %369 = vmatpush2.msra.mxu0 0.0
    %370 = vmatprep.subr.mxu0 0.0
    %371 = vmatpush2.msra.mxu0 0.0
    %372 = vmatprep.subr.mxu0 0.0
    %373 = vmatpush2.msra.mxu0 0.0
    %374 = vmatprep.subr.mxu0 0.0
    %375 = vmatpush2.msra.mxu0 0.0
    %376 = vmatprep.subr.mxu0 0.0
    %377 = vmatpush2.msra.mxu0 0.0
    %378 = vmatprep.subr.mxu0 0.0
    %379 = vmatpush2.msra.mxu0 0.0
    %380 = vmatprep.subr.mxu0 0.0
    %381 = vmatpush2.msra.mxu0 0.0
    %382 = vmatprep.subr.mxu0 0.0
    %383 = vmatpush2.msra.mxu0 0.0
    %384 = vmatprep.subr.mxu0 0.0
    %385 = vmatpush2.msra.mxu0 0.0
    %386 = vmatprep.mubr.f32.mxu0 0.0
    %387 = vmatmul.mubr.f32.gmra.mxu0 %v320
    %v388 = vpop.f32.mrf.mxu0
    %v389 = vadd.f32 0.0, %v388
    %v390 = vpop.f32.mrf.mxu0
    %391 = vdwg.mxu0
    %v392 = vadd.f32 %v182, %v389
    %v393 = vxor.u32 %v392, 2147483648
    %v394 = vmul.f32 %v393, 1.442695
    %v395 = vpow.pop %v394
    %v396 = vadd.f32 %v395, 1.0
    %v397 = vrcp.pop %v396
    %v398 = vmul.f32 1.0, %v397
    %v399 = vtanh.pop %v392
    %v400 = vmul.f32 %v398, %v310
    %402 = vrot.lane.b32.xlu0 %v399, 64
    %v403 = vpop.permute.xlu0 %402
    %v405 = vmul.f32 %v398, %v403
    %407 = vrot.lane.b32.xlu0 %v405, 32
    %v408 = vpop.permute.xlu0 %407
    %v410 = vadd.f32 %v400, %v408
    %v411 = vtanh.pop %v410
    %413 = vrot.lane.b32.xlu0 %v411, 64
    %v414 = vpop.permute.xlu0 %413
    %v416 = vmul.f32 %v398, %v414
    %418 = vrot.lane.b32.xlu0 %v416, 32
    %v419 = vpop.permute.xlu0 %418
    %v420 = vsel %vm85, %v419, 0
    %422 = vmatprep.subr.mxu0 0.0
    %423 = vmatpush1.msra.mxu0 0.0
    %424 = vmatprep.subr.mxu0 0.0
    %425 = vmatpush1.msra.mxu0 0.0
    %426 = vmatprep.subr.mxu0 0.0
    %427 = vmatpush1.msra.mxu0 0.0
    %428 = vmatprep.subr.mxu0 0.0
    %429 = vmatpush1.msra.mxu0 0.0
    %430 = vmatprep.subr.mxu0 0.0
    %431 = vmatpush1.msra.mxu0 0.0
    %432 = vmatprep.subr.mxu0 0.0
    %433 = vmatpush1.msra.mxu0 0.0
    %434 = vmatprep.subr.mxu0 0.0
    %435 = vmatpush1.msra.mxu0 0.0
    %436 = vmatprep.subr.mxu0 0.0
    %437 = vmatpush1.msra.mxu0 0.0
    %438 = vmatprep.subr.mxu0 0.0
    %439 = vmatpush1.msra.mxu0 0.0
    %440 = vmatprep.subr.mxu0 0.0
    %441 = vmatpush1.msra.mxu0 0.0
    %442 = vmatprep.subr.mxu0 0.0
    %443 = vmatpush1.msra.mxu0 0.0
    %444 = vmatprep.subr.mxu0 0.0
    %445 = vmatpush1.msra.mxu0 0.0
    %446 = vmatprep.subr.mxu0 0.0
    %447 = vmatpush1.msra.mxu0 %v218
    %448 = vmatprep.subr.mxu0 0.0
    %449 = vmatpush1.msra.mxu0 %v217
    %450 = vmatprep.subr.mxu0 0.0
    %451 = vmatpush1.msra.mxu0 %v216
    %452 = vmatprep.subr.mxu0 0.0
    %453 = vmatpush1.msra.mxu0 %v215
    %454 = vmatprep.subr.mxu0 0.0
    %455 = vmatpush2.msra.mxu0 0.0
    %456 = vmatprep.subr.mxu0 0.0
    %457 = vmatpush2.msra.mxu0 0.0
    %458 = vmatprep.subr.mxu0 0.0
    %459 = vmatpush2.msra.mxu0 0.0
    %460 = vmatprep.subr.mxu0 0.0
    %461 = vmatpush2.msra.mxu0 0.0
    %462 = vmatprep.subr.mxu0 0.0
    %463 = vmatpush2.msra.mxu0 0.0
    %464 = vmatprep.subr.mxu0 0.0
    %465 = vmatpush2.msra.mxu0 0.0
    %466 = vmatprep.subr.mxu0 0.0
    %467 = vmatpush2.msra.mxu0 0.0
    %468 = vmatprep.subr.mxu0 0.0
    %469 = vmatpush2.msra.mxu0 0.0
    %470 = vmatprep.subr.mxu0 0.0
    %471 = vmatpush2.msra.mxu0 0.0
    %472 = vmatprep.subr.mxu0 0.0
    %473 = vmatpush2.msra.mxu0 0.0
    %474 = vmatprep.subr.mxu0 0.0
    %475 = vmatpush2.msra.mxu0 0.0
    %476 = vmatprep.subr.mxu0 0.0
    %477 = vmatpush2.msra.mxu0 0.0
    %478 = vmatprep.subr.mxu0 0.0
    %479 = vmatpush2.msra.mxu0 0.0
    %480 = vmatprep.subr.mxu0 0.0
    %481 = vmatpush2.msra.mxu0 0.0
    %482 = vmatprep.subr.mxu0 0.0
    %483 = vmatpush2.msra.mxu0 0.0
    %484 = vmatprep.subr.mxu0 0.0
    %485 = vmatpush2.msra.mxu0 0.0
    %486 = vmatprep.mubr.f32.mxu0 0.0
    %487 = vmatmul.mubr.f32.gmra.mxu0 %v420
    %v488 = vpop.f32.mrf.mxu0
    %v489 = vadd.f32 0.0, %v488
    %v490 = vpop.f32.mrf.mxu0
    %491 = vdwg.mxu0
    %v492 = vadd.f32 %v187, %v489
    %v493 = vxor.u32 %v492, 2147483648
    %v494 = vmul.f32 %v493, 1.442695
    %v495 = vpow.pop %v494
    %v496 = vadd.f32 %v495, 1.0
    %v497 = vrcp.pop %v496
    %v498 = vmul.f32 1.0, %v497
    %v499 = vtanh.pop %v492
    %v500 = vmul.f32 %v498, %v410
    %502 = vrot.lane.b32.xlu0 %v499, 64
    %v503 = vpop.permute.xlu0 %502
    %v505 = vmul.f32 %v498, %v503
    %507 = vrot.lane.b32.xlu0 %v505, 32
    %v508 = vpop.permute.xlu0 %507
    %v510 = vadd.f32 %v500, %v508
    %v511 = vtanh.pop %v510
    %513 = vrot.lane.b32.xlu0 %v511, 64
    %v514 = vpop.permute.xlu0 %513
    %v516 = vmul.f32 %v498, %v514
    %518 = vrot.lane.b32.xlu0 %v516, 32
    %v519 = vpop.permute.xlu0 %518
    %v520 = vsel %vm85, %v519, 0
    %522 = vmatprep.subr.mxu0 0.0
    %523 = vmatpush1.msra.mxu0 0.0
    %524 = vmatprep.subr.mxu0 0.0
    %525 = vmatpush1.msra.mxu0 0.0
    %526 = vmatprep.subr.mxu0 0.0
    %527 = vmatpush1.msra.mxu0 0.0
    %528 = vmatprep.subr.mxu0 0.0
    %529 = vmatpush1.msra.mxu0 0.0
    %530 = vmatprep.subr.mxu0 0.0
    %531 = vmatpush1.msra.mxu0 0.0
    %532 = vmatprep.subr.mxu0 0.0
    %533 = vmatpush1.msra.mxu0 0.0
    %534 = vmatprep.subr.mxu0 0.0
    %535 = vmatpush1.msra.mxu0 0.0
    %536 = vmatprep.subr.mxu0 0.0
    %537 = vmatpush1.msra.mxu0 0.0
    %538 = vmatprep.subr.mxu0 0.0
    %539 = vmatpush1.msra.mxu0 0.0
    %540 = vmatprep.subr.mxu0 0.0
    %541 = vmatpush1.msra.mxu0 0.0
    %542 = vmatprep.subr.mxu0 0.0
    %543 = vmatpush1.msra.mxu0 0.0
    %544 = vmatprep.subr.mxu0 0.0
    %545 = vmatpush1.msra.mxu0 0.0
    %546 = vmatprep.subr.mxu0 0.0
    %547 = vmatpush1.msra.mxu0 %v218
    %548 = vmatprep.subr.mxu0 0.0
    %549 = vmatpush1.msra.mxu0 %v217
    %550 = vmatprep.subr.mxu0 0.0
    %551 = vmatpush1.msra.mxu0 %v216
    %552 = vmatprep.subr.mxu0 0.0
    %553 = vmatpush1.msra.mxu0 %v215
    %554 = vmatprep.subr.mxu0 0.0
    %555 = vmatpush2.msra.mxu0 0.0
    %556 = vmatprep.subr.mxu0 0.0
    %557 = vmatpush2.msra.mxu0 0.0
    %558 = vmatprep.subr.mxu0 0.0
    %559 = vmatpush2.msra.mxu0 0.0
    %560 = vmatprep.subr.mxu0 0.0
    %561 = vmatpush2.msra.mxu0 0.0
    %562 = vmatprep.subr.mxu0 0.0
    %563 = vmatpush2.msra.mxu0 0.0
    %564 = vmatprep.subr.mxu0 0.0
    %565 = vmatpush2.msra.mxu0 0.0
    %566 = vmatprep.subr.mxu0 0.0
    %567 = vmatpush2.msra.mxu0 0.0
    %568 = vmatprep.subr.mxu0 0.0
    %569 = vmatpush2.msra.mxu0 0.0
    %570 = vmatprep.subr.mxu0 0.0
    %571 = vmatpush2.msra.mxu0 0.0
    %572 = vmatprep.subr.mxu0 0.0
    %573 = vmatpush2.msra.mxu0 0.0
    %574 = vmatprep.subr.mxu0 0.0
    %575 = vmatpush2.msra.mxu0 0.0
    %576 = vmatprep.subr.mxu0 0.0
    %577 = vmatpush2.msra.mxu0 0.0
    %578 = vmatprep.subr.mxu0 0.0
    %579 = vmatpush2.msra.mxu0 0.0
    %580 = vmatprep.subr.mxu0 0.0
    %581 = vmatpush2.msra.mxu0 0.0
    %582 = vmatprep.subr.mxu0 0.0
    %583 = vmatpush2.msra.mxu0 0.0
    %584 = vmatprep.subr.mxu0 0.0
    %585 = vmatpush2.msra.mxu0 0.0
    %586 = vmatprep.mubr.f32.mxu0 0.0
    %587 = vmatmul.mubr.f32.gmra.mxu0 %v520
    %v588 = vpop.f32.mrf.mxu0
    %v589 = vadd.f32 0.0, %v588
    %v590 = vpop.f32.mrf.mxu0
    %591 = vdwg.mxu0
    %v592 = vadd.f32 %v192, %v589
    %v593 = vxor.u32 %v592, 2147483648
    %v594 = vmul.f32 %v593, 1.442695
    %v595 = vpow.pop %v594
    %v596 = vadd.f32 %v595, 1.0
    %v597 = vrcp.pop %v596
    %v598 = vmul.f32 1.0, %v597
    %v599 = vtanh.pop %v592
    %v600 = vmul.f32 %v598, %v510
    %602 = vrot.lane.b32.xlu0 %v599, 64
    %v603 = vpop.permute.xlu0 %602
    %v605 = vmul.f32 %v598, %v603
    %607 = vrot.lane.b32.xlu0 %v605, 32
    %v608 = vpop.permute.xlu0 %607
    %v610 = vadd.f32 %v600, %v608
    %v611 = vtanh.pop %v610
    %613 = vrot.lane.b32.xlu0 %v611, 64
    %v614 = vpop.permute.xlu0 %613
    %v616 = vmul.f32 %v598, %v614
    %618 = vrot.lane.b32.xlu0 %v616, 32
    %v619 = vpop.permute.xlu0 %618
    %v620 = vsel %vm85, %v619, 0
    %622 = vmatprep.subr.mxu0 0.0
    %623 = vmatpush1.msra.mxu0 0.0
    %624 = vmatprep.subr.mxu0 0.0
    %625 = vmatpush1.msra.mxu0 0.0
    %626 = vmatprep.subr.mxu0 0.0
    %627 = vmatpush1.msra.mxu0 0.0
    %628 = vmatprep.subr.mxu0 0.0
    %629 = vmatpush1.msra.mxu0 0.0
    %630 = vmatprep.subr.mxu0 0.0
    %631 = vmatpush1.msra.mxu0 0.0
    %632 = vmatprep.subr.mxu0 0.0
    %633 = vmatpush1.msra.mxu0 0.0
    %634 = vmatprep.subr.mxu0 0.0
    %635 = vmatpush1.msra.mxu0 0.0
    %636 = vmatprep.subr.mxu0 0.0
    %637 = vmatpush1.msra.mxu0 0.0
    %638 = vmatprep.subr.mxu0 0.0
    %639 = vmatpush1.msra.mxu0 0.0
    %640 = vmatprep.subr.mxu0 0.0
    %641 = vmatpush1.msra.mxu0 0.0
    %642 = vmatprep.subr.mxu0 0.0
    %643 = vmatpush1.msra.mxu0 0.0
    %644 = vmatprep.subr.mxu0 0.0
    %645 = vmatpush1.msra.mxu0 0.0
    %646 = vmatprep.subr.mxu0 0.0
    %647 = vmatpush1.msra.mxu0 %v218
    %648 = vmatprep.subr.mxu0 0.0
    %649 = vmatpush1.msra.mxu0 %v217
    %650 = vmatprep.subr.mxu0 0.0
    %651 = vmatpush1.msra.mxu0 %v216
    %652 = vmatprep.subr.mxu0 0.0
    %653 = vmatpush1.msra.mxu0 %v215
    %654 = vmatprep.subr.mxu0 0.0
    %655 = vmatpush2.msra.mxu0 0.0
    %656 = vmatprep.subr.mxu0 0.0
    %657 = vmatpush2.msra.mxu0 0.0
    %658 = vmatprep.subr.mxu0 0.0
    %659 = vmatpush2.msra.mxu0 0.0
    %660 = vmatprep.subr.mxu0 0.0
    %661 = vmatpush2.msra.mxu0 0.0
    %662 = vmatprep.subr.mxu0 0.0
    %663 = vmatpush2.msra.mxu0 0.0
    %664 = vmatprep.subr.mxu0 0.0
    %665 = vmatpush2.msra.mxu0 0.0
    %666 = vmatprep.subr.mxu0 0.0
    %667 = vmatpush2.msra.mxu0 0.0
    %668 = vmatprep.subr.mxu0 0.0
    %669 = vmatpush2.msra.mxu0 0.0
    %670 = vmatprep.subr.mxu0 0.0
    %671 = vmatpush2.msra.mxu0 0.0
    %672 = vmatprep.subr.mxu0 0.0
    %673 = vmatpush2.msra.mxu0 0.0
    %674 = vmatprep.subr.mxu0 0.0
    %675 = vmatpush2.msra.mxu0 0.0
    %676 = vmatprep.subr.mxu0 0.0
    %677 = vmatpush2.msra.mxu0 0.0
    %678 = vmatprep.subr.mxu0 0.0
    %679 = vmatpush2.msra.mxu0 0.0
    %680 = vmatprep.subr.mxu0 0.0
    %681 = vmatpush2.msra.mxu0 0.0
    %682 = vmatprep.subr.mxu0 0.0
    %683 = vmatpush2.msra.mxu0 0.0
    %684 = vmatprep.subr.mxu0 0.0
    %685 = vmatpush2.msra.mxu0 0.0
    %686 = vmatprep.mubr.f32.mxu0 0.0
    %687 = vmatmul.mubr.f32.gmra.mxu0 %v620
    %v688 = vpop.f32.mrf.mxu0
    %v689 = vadd.f32 0.0, %v688
    %v690 = vpop.f32.mrf.mxu0
    %691 = vdwg.mxu0
    %v692 = vadd.f32 %v197, %v689
    %v693 = vxor.u32 %v692, 2147483648
    %v694 = vmul.f32 %v693, 1.442695
    %v695 = vpow.pop %v694
    %v696 = vadd.f32 %v695, 1.0
    %v697 = vrcp.pop %v696
    %v698 = vmul.f32 1.0, %v697
    %v699 = vtanh.pop %v692
    %v700 = vmul.f32 %v698, %v610
    %702 = vrot.lane.b32.xlu0 %v699, 64
    %v703 = vpop.permute.xlu0 %702
    %v705 = vmul.f32 %v698, %v703
    %707 = vrot.lane.b32.xlu0 %v705, 32
    %v708 = vpop.permute.xlu0 %707
    %v710 = vadd.f32 %v700, %v708
    %v711 = vtanh.pop %v710
    %713 = vrot.lane.b32.xlu0 %v711, 64
    %v714 = vpop.permute.xlu0 %713
    %v716 = vmul.f32 %v698, %v714
    %718 = vrot.lane.b32.xlu0 %v716, 32
    %v719 = vpop.permute.xlu0 %718
    %v720 = vsel %vm85, %v719, 0
    %722 = vmatprep.subr.mxu0 0.0
    %723 = vmatpush1.msra.mxu0 0.0
    %724 = vmatprep.subr.mxu0 0.0
    %725 = vmatpush1.msra.mxu0 0.0
    %726 = vmatprep.subr.mxu0 0.0
    %727 = vmatpush1.msra.mxu0 0.0
    %728 = vmatprep.subr.mxu0 0.0
    %729 = vmatpush1.msra.mxu0 0.0
    %730 = vmatprep.subr.mxu0 0.0
    %731 = vmatpush1.msra.mxu0 0.0
    %732 = vmatprep.subr.mxu0 0.0
    %733 = vmatpush1.msra.mxu0 0.0
    %734 = vmatprep.subr.mxu0 0.0
    %735 = vmatpush1.msra.mxu0 0.0
    %736 = vmatprep.subr.mxu0 0.0
    %737 = vmatpush1.msra.mxu0 0.0
    %738 = vmatprep.subr.mxu0 0.0
    %739 = vmatpush1.msra.mxu0 0.0
    %740 = vmatprep.subr.mxu0 0.0
    %741 = vmatpush1.msra.mxu0 0.0
    %742 = vmatprep.subr.mxu0 0.0
    %743 = vmatpush1.msra.mxu0 0.0
    %744 = vmatprep.subr.mxu0 0.0
    %745 = vmatpush1.msra.mxu0 0.0
    %746 = vmatprep.subr.mxu0 0.0
    %747 = vmatpush1.msra.mxu0 %v218
    %748 = vmatprep.subr.mxu0 0.0
    %749 = vmatpush1.msra.mxu0 %v217
    %750 = vmatprep.subr.mxu0 0.0
    %751 = vmatpush1.msra.mxu0 %v216
    %752 = vmatprep.subr.mxu0 0.0
    %753 = vmatpush1.msra.mxu0 %v215
    %754 = vmatprep.subr.mxu0 0.0
    %755 = vmatpush2.msra.mxu0 0.0
    %756 = vmatprep.subr.mxu0 0.0
    %757 = vmatpush2.msra.mxu0 0.0
    %758 = vmatprep.subr.mxu0 0.0
    %759 = vmatpush2.msra.mxu0 0.0
    %760 = vmatprep.subr.mxu0 0.0
    %761 = vmatpush2.msra.mxu0 0.0
    %762 = vmatprep.subr.mxu0 0.0
    %763 = vmatpush2.msra.mxu0 0.0
    %764 = vmatprep.subr.mxu0 0.0
    %765 = vmatpush2.msra.mxu0 0.0
    %766 = vmatprep.subr.mxu0 0.0
    %767 = vmatpush2.msra.mxu0 0.0
    %768 = vmatprep.subr.mxu0 0.0
    %769 = vmatpush2.msra.mxu0 0.0
    %770 = vmatprep.subr.mxu0 0.0
    %771 = vmatpush2.msra.mxu0 0.0
    %772 = vmatprep.subr.mxu0 0.0
    %773 = vmatpush2.msra.mxu0 0.0
    %774 = vmatprep.subr.mxu0 0.0
    %775 = vmatpush2.msra.mxu0 0.0
    %776 = vmatprep.subr.mxu0 0.0
    %777 = vmatpush2.msra.mxu0 0.0
    %778 = vmatprep.subr.mxu0 0.0
    %779 = vmatpush2.msra.mxu0 0.0
    %780 = vmatprep.subr.mxu0 0.0
    %781 = vmatpush2.msra.mxu0 0.0
    %782 = vmatprep.subr.mxu0 0.0
    %783 = vmatpush2.msra.mxu0 0.0
    %784 = vmatprep.subr.mxu0 0.0
    %785 = vmatpush2.msra.mxu0 0.0
    %786 = vmatprep.mubr.f32.mxu0 0.0
    %787 = vmatmul.mubr.f32.gmra.mxu0 %v720
    %v788 = vpop.f32.mrf.mxu0
    %v789 = vadd.f32 0.0, %v788
    %v790 = vpop.f32.mrf.mxu0
    %791 = vdwg.mxu0
    %v792 = vadd.f32 %v202, %v789
    %v793 = vxor.u32 %v792, 2147483648
    %v794 = vmul.f32 %v793, 1.442695
    %v795 = vpow.pop %v794
    %v796 = vadd.f32 %v795, 1.0
    %v797 = vrcp.pop %v796
    %v798 = vmul.f32 1.0, %v797
    %v799 = vtanh.pop %v792
    %v800 = vmul.f32 %v798, %v710
    %802 = vrot.lane.b32.xlu0 %v799, 64
    %v803 = vpop.permute.xlu0 %802
    %v805 = vmul.f32 %v798, %v803
    %807 = vrot.lane.b32.xlu0 %v805, 32
    %v808 = vpop.permute.xlu0 %807
    %v810 = vadd.f32 %v800, %v808
    %v811 = vtanh.pop %v810
    %813 = vrot.lane.b32.xlu0 %v811, 64
    %v814 = vpop.permute.xlu0 %813
    %v816 = vmul.f32 %v798, %v814
    %818 = vrot.lane.b32.xlu0 %v816, 32
    %v819 = vpop.permute.xlu0 %818
    %v820 = vsel %vm85, %v819, 0
    %822 = vmatprep.subr.mxu0 0.0
    %823 = vmatpush1.msra.mxu0 0.0
    %824 = vmatprep.subr.mxu0 0.0
    %825 = vmatpush1.msra.mxu0 0.0
    %826 = vmatprep.subr.mxu0 0.0
    %827 = vmatpush1.msra.mxu0 0.0
    %828 = vmatprep.subr.mxu0 0.0
    %829 = vmatpush1.msra.mxu0 0.0
    %830 = vmatprep.subr.mxu0 0.0
    %831 = vmatpush1.msra.mxu0 0.0
    %832 = vmatprep.subr.mxu0 0.0
    %833 = vmatpush1.msra.mxu0 0.0
    %834 = vmatprep.subr.mxu0 0.0
    %835 = vmatpush1.msra.mxu0 0.0
    %836 = vmatprep.subr.mxu0 0.0
    %837 = vmatpush1.msra.mxu0 0.0
    %838 = vmatprep.subr.mxu0 0.0
    %839 = vmatpush1.msra.mxu0 0.0
    %840 = vmatprep.subr.mxu0 0.0
    %841 = vmatpush1.msra.mxu0 0.0
    %842 = vmatprep.subr.mxu0 0.0
    %843 = vmatpush1.msra.mxu0 0.0
    %844 = vmatprep.subr.mxu0 0.0
    %845 = vmatpush1.msra.mxu0 0.0
    %846 = vmatprep.subr.mxu0 0.0
    %847 = vmatpush1.msra.mxu0 %v218
    %848 = vmatprep.subr.mxu0 0.0
    %849 = vmatpush1.msra.mxu0 %v217
    %850 = vmatprep.subr.mxu0 0.0
    %851 = vmatpush1.msra.mxu0 %v216
    %852 = vmatprep.subr.mxu0 0.0
    %853 = vmatpush1.msra.mxu0 %v215
    %854 = vmatprep.subr.mxu0 0.0
    %855 = vmatpush2.msra.mxu0 0.0
    %856 = vmatprep.subr.mxu0 0.0
    %857 = vmatpush2.msra.mxu0 0.0
    %858 = vmatprep.subr.mxu0 0.0
    %859 = vmatpush2.msra.mxu0 0.0
    %860 = vmatprep.subr.mxu0 0.0
    %861 = vmatpush2.msra.mxu0 0.0
    %862 = vmatprep.subr.mxu0 0.0
    %863 = vmatpush2.msra.mxu0 0.0
    %864 = vmatprep.subr.mxu0 0.0
    %865 = vmatpush2.msra.mxu0 0.0
    %866 = vmatprep.subr.mxu0 0.0
    %867 = vmatpush2.msra.mxu0 0.0
    %868 = vmatprep.subr.mxu0 0.0
    %869 = vmatpush2.msra.mxu0 0.0
    %870 = vmatprep.subr.mxu0 0.0
    %871 = vmatpush2.msra.mxu0 0.0
    %872 = vmatprep.subr.mxu0 0.0
    %873 = vmatpush2.msra.mxu0 0.0
    %874 = vmatprep.subr.mxu0 0.0
    %875 = vmatpush2.msra.mxu0 0.0
    %876 = vmatprep.subr.mxu0 0.0
    %877 = vmatpush2.msra.mxu0 0.0
    %878 = vmatprep.subr.mxu0 0.0
    %879 = vmatpush2.msra.mxu0 0.0
    %880 = vmatprep.subr.mxu0 0.0
    %881 = vmatpush2.msra.mxu0 0.0
    %882 = vmatprep.subr.mxu0 0.0
    %883 = vmatpush2.msra.mxu0 0.0
    %884 = vmatprep.subr.mxu0 0.0
    %885 = vmatpush2.msra.mxu0 0.0
    %886 = vmatprep.mubr.f32.mxu0 0.0
    %887 = vmatmul.mubr.f32.gmra.mxu0 %v820
    %v888 = vpop.f32.mrf.mxu0
    %v889 = vadd.f32 0.0, %v888
    %v890 = vpop.f32.mrf.mxu0
    %891 = vdwg.mxu0
    %v892 = vadd.f32 %v207, %v889
    %v893 = vxor.u32 %v892, 2147483648
    %v894 = vmul.f32 %v893, 1.442695
    %v895 = vpow.pop %v894
    %v896 = vadd.f32 %v895, 1.0
    %v897 = vrcp.pop %v896
    %v898 = vmul.f32 1.0, %v897
    %v899 = vtanh.pop %v892
    %v900 = vmul.f32 %v898, %v810
    %902 = vrot.lane.b32.xlu0 %v899, 64
    %v903 = vpop.permute.xlu0 %902
    %v905 = vmul.f32 %v898, %v903
    %907 = vrot.lane.b32.xlu0 %v905, 32
    %v908 = vpop.permute.xlu0 %907
    %v910 = vadd.f32 %v900, %v908
    %v911 = vtanh.pop %v910
    %913 = vrot.lane.b32.xlu0 %v911, 64
    %v914 = vpop.permute.xlu0 %913
    %v916 = vmul.f32 %v898, %v914
    %918 = vrot.lane.b32.xlu0 %v916, 32
    %v919 = vpop.permute.xlu0 %918
    %v920 = vsel %vm85, %v919, 0
    %922 = vmatprep.subr.mxu0 0.0
    %923 = vmatpush1.msra.mxu0 0.0
    %924 = vmatprep.subr.mxu0 0.0
    %925 = vmatpush1.msra.mxu0 0.0
    %926 = vmatprep.subr.mxu0 0.0
    %927 = vmatpush1.msra.mxu0 0.0
    %928 = vmatprep.subr.mxu0 0.0
    %929 = vmatpush1.msra.mxu0 0.0
    %930 = vmatprep.subr.mxu0 0.0
    %931 = vmatpush1.msra.mxu0 0.0
    %932 = vmatprep.subr.mxu0 0.0
    %933 = vmatpush1.msra.mxu0 0.0
    %934 = vmatprep.subr.mxu0 0.0
    %935 = vmatpush1.msra.mxu0 0.0
    %936 = vmatprep.subr.mxu0 0.0
    %937 = vmatpush1.msra.mxu0 0.0
    %938 = vmatprep.subr.mxu0 0.0
    %939 = vmatpush1.msra.mxu0 0.0
    %940 = vmatprep.subr.mxu0 0.0
    %941 = vmatpush1.msra.mxu0 0.0
    %942 = vmatprep.subr.mxu0 0.0
    %943 = vmatpush1.msra.mxu0 0.0
    %944 = vmatprep.subr.mxu0 0.0
    %945 = vmatpush1.msra.mxu0 0.0
    %946 = vmatprep.subr.mxu0 0.0
    %947 = vmatpush1.msra.mxu0 %v218
    %948 = vmatprep.subr.mxu0 0.0
    %949 = vmatpush1.msra.mxu0 %v217
    %950 = vmatprep.subr.mxu0 0.0
    %951 = vmatpush1.msra.mxu0 %v216
    %952 = vmatprep.subr.mxu0 0.0
    %953 = vmatpush1.msra.mxu0 %v215
    %954 = vmatprep.subr.mxu0 0.0
    %955 = vmatpush2.msra.mxu0 0.0
    %956 = vmatprep.subr.mxu0 0.0
    %957 = vmatpush2.msra.mxu0 0.0
    %958 = vmatprep.subr.mxu0 0.0
    %959 = vmatpush2.msra.mxu0 0.0
    %960 = vmatprep.subr.mxu0 0.0
    %961 = vmatpush2.msra.mxu0 0.0
    %962 = vmatprep.subr.mxu0 0.0
    %963 = vmatpush2.msra.mxu0 0.0
    %964 = vmatprep.subr.mxu0 0.0
    %965 = vmatpush2.msra.mxu0 0.0
    %966 = vmatprep.subr.mxu0 0.0
    %967 = vmatpush2.msra.mxu0 0.0
    %968 = vmatprep.subr.mxu0 0.0
    %969 = vmatpush2.msra.mxu0 0.0
    %970 = vmatprep.subr.mxu0 0.0
    %971 = vmatpush2.msra.mxu0 0.0
    %972 = vmatprep.subr.mxu0 0.0
    %973 = vmatpush2.msra.mxu0 0.0
    %974 = vmatprep.subr.mxu0 0.0
    %975 = vmatpush2.msra.mxu0 0.0
    %976 = vmatprep.subr.mxu0 0.0
    %977 = vmatpush2.msra.mxu0 0.0
    %978 = vmatprep.subr.mxu0 0.0
    %979 = vmatpush2.msra.mxu0 0.0
    %980 = vmatprep.subr.mxu0 0.0
    %981 = vmatpush2.msra.mxu0 0.0
    %982 = vmatprep.subr.mxu0 0.0
    %983 = vmatpush2.msra.mxu0 0.0
    %984 = vmatprep.subr.mxu0 0.0
    %985 = vmatpush2.msra.mxu0 0.0
    %986 = vmatprep.mubr.f32.mxu0 0.0
    %987 = vmatmul.mubr.f32.gmra.mxu0 %v920
    %v988 = vpop.f32.mrf.mxu0
    %v989 = vadd.f32 0.0, %v988
    %v990 = vpop.f32.mrf.mxu0
    %991 = vdwg.mxu0
    %v992 = vadd.f32 %v212, %v989
    %v993 = vxor.u32 %v992, 2147483648
    %v994 = vmul.f32 %v993, 1.442695
    %v995 = vpow.pop %v994
    %v996 = vadd.f32 %v995, 1.0
    %v997 = vrcp.pop %v996
    %v998 = vmul.f32 1.0, %v997
    %v999 = vtanh.pop %v992
    %v1000 = vmul.f32 %v998, %v910
    %1002 = vrot.lane.b32.xlu0 %v999, 64
    %v1003 = vpop.permute.xlu0 %1002
    %v1005 = vmul.f32 %v998, %v1003
    %1007 = vrot.lane.b32.xlu0 %v1005, 32
    %v1008 = vpop.permute.xlu0 %1007
    %v1010 = vadd.f32 %v1000, %v1008
    %v1011 = vtanh.pop %v1010
    %1013 = vrot.lane.b32.xlu0 %v1011, 64
    %v1014 = vpop.permute.xlu0 %1013
    %v1016 = vmul.f32 %v998, %v1014
    %v1017 = vld [vmem:[%s4] sm:$0x1]
    %v1019 = vlaneseq
    %v1020 = vshrl.u32 %v1019, 7
    %v1021 = vsub.s32 0, %v1020
    %v1022 = vrot.slane %v1017, %v1021
    %1023 = vrot.lane.b32.xlu0 %v1022, 96
    %v1024 = vpop.permute.xlu0 %1023
    %v1026 = vmul.f32 %v1016, %v1024
    %1028 = vrot.lane.b32.xlu0 %v1026, 32
    %v1029 = vpop.permute.xlu0 %1028
    %v1031 = vsel %vm85, %v1029, 0.0
    %1032 = vadd.xlane.f32.xlu0 %v1031
    %v1033 = vpop.xlane.xlu0 %1032
    %v1034 = vld [vmem:[#allocation2] sm:$0x1]
    %v1036 = vlaneseq
    %v1037 = vshrl.u32 %v1036, 7
    %v1038 = vsub.s32 0, %v1037
    %v1039 = vrot.slane %v1034, %v1038
    %v1041 = vadd.f32 %v1033, %v1039
    %vm1042 = vcmask 7168
    %1043 = vst.msk [vmem:[%s6] sm:$0xff] %vm1042, %v1041
    // Predicated region
    $region38: #{tpu_custom_call.1} parent=1 // pred_check
      _
    $region39: #{tpu_custom_call.1} parent=1 // pred_check_branch
      %1045 = sbr.rel (0) target = $region41
    $region40: #{tpu_custom_call.1} parent=1 // pred_region
      _
    $region41: #{tpu_custom_call.1} parent=1 // pred_fallthru
      _
    // Predicated region
    $region42: #{tpu_custom_call.1} parent=1 // pred_check
      _
    $region43: #{tpu_custom_call.1} parent=1 // pred_check_branch
      %1047 = sbr.rel (0) target = $region45
    $region44: #{tpu_custom_call.1} parent=1 // pred_region
      _
    $region45: #{tpu_custom_call.1} parent=1 // pred_fallthru
      _
    %1048 = vsyncpa [#allocation4], 1
    %1049 = vsyncpa [#allocation6], 1

</llo_original>
